<compile_context>
chip_gen: v6e
topology: v6e:2x2x1
jax: 0.10.0
libtpu: 0.0.40
codegen_flags: <defaults>
</compile_context>

<pallas_src>
import functools

import jax
import jax.numpy as jnp
from jax.experimental import pallas as pl
from jax.experimental.pallas import tpu as pltpu

EPS = 1e-5
ACT_DTYPE = jnp.bfloat16


def _round_up(x, m):
    return ((x + m - 1) // m) * m


def _pick_div(total, candidates):
    for c in candidates:
        if total % c == 0:
            return c
    return None


def _kp_of(k):
    return k if k <= 128 else _round_up(k, 128)


def _np_of(n):
    return n if (n == 64 or n % 128 == 0) else _round_up(n, 128)


# ----------------------------------------------------------------------------
# Pallas kernels
# ----------------------------------------------------------------------------
def _mm_kernel(a_ref, b_ref, o_ref, acc_ref):
    @pl.when(pl.program_id(2) == 0)
    def _():
        acc_ref[...] = jnp.zeros_like(acc_ref)

    acc_ref[...] += jnp.dot(a_ref[...], b_ref[...],
                            preferred_element_type=jnp.float32)

    @pl.when(pl.program_id(2) == pl.num_programs(2) - 1)
    def _():
        o_ref[...] = acc_ref[...].astype(o_ref.dtype)


def _mm_stats_kernel(a_ref, b_ref, o_ref, st_ref, acc_ref):
    """Matmul + per-channel partial sum / sumsq emitted from the f32 accumulator."""
    @pl.when(pl.program_id(2) == 0)
    def _():
        acc_ref[...] = jnp.zeros_like(acc_ref)

    acc_ref[...] += jnp.dot(a_ref[...], b_ref[...],
                            preferred_element_type=jnp.float32)

    @pl.when(pl.program_id(2) == pl.num_programs(2) - 1)
    def _():
        acc = acc_ref[...]
        o_ref[...] = acc.astype(o_ref.dtype)
        st_ref[pl.ds(0, 1), :] = jnp.sum(acc, axis=0, keepdims=True)
        st_ref[pl.ds(1, 1), :] = jnp.sum(acc * acc, axis=0, keepdims=True)


def pallas_matmul(a, w, n_real=None, *, with_stats=False, out_dtype=ACT_DTYPE):
    """a: (M, Kp) float, w: (Kp, Np) bf16 pre-padded weight.  Returns (M, n_real)
    (bf16 by default) and, if with_stats, per-channel sum / sumsq (f32)."""
    M, Kp = a.shape
    Kp2, Np = w.shape
    assert Kp == Kp2, (Kp, Kp2)
    if n_real is None:
        n_real = Np
    a = a.astype(jnp.bfloat16)

    # --- tile selection (no activation padding at the demo shapes) ---
    if M > 256:
        tm = 128
        Mp = _round_up(M, 128)
    else:
        Mp = max(16, _round_up(M, 16))
        tm = Mp
    if Mp != M:
        a = jnp.pad(a, ((0, Mp - M), (0, 0)))
    tk = Kp if Kp <= 128 else _pick_div(Kp, [512, 384, 256, 128])
    tn = Np if Np <= 256 else _pick_div(Np, [256, 128])
    grid = (Mp // tm, Np // tn, Kp // tk)

    in_specs = [pl.BlockSpec((tm, tk), lambda i, j, k: (i, k)),
                pl.BlockSpec((tk, tn), lambda i, j, k: (k, j))]
    cparams = pltpu.CompilerParams(
        dimension_semantics=("parallel", "parallel", "arbitrary"))

    if with_stats:
        nmb = Mp // tm
        y, st = pl.pallas_call(
            _mm_stats_kernel,
            out_shape=(jax.ShapeDtypeStruct((Mp, Np), out_dtype),
                       jax.ShapeDtypeStruct((nmb * 8, Np), jnp.float32)),
            grid_spec=pltpu.PrefetchScalarGridSpec(
                num_scalar_prefetch=0, grid=grid,
                in_specs=in_specs,
                out_specs=(pl.BlockSpec((tm, tn), lambda i, j, k: (i, j)),
                           pl.BlockSpec((8, tn), lambda i, j, k: (i, j))),
                scratch_shapes=[pltpu.VMEM((tm, tn), jnp.float32)]),
            compiler_params=cparams,
        )(a, w)
        st = st.reshape(nmb, 8, Np)
        s = jnp.sum(st[:, 0, :n_real], axis=0)      # (n_real,)
        ss = jnp.sum(st[:, 1, :n_real], axis=0)     # (n_real,)
        if Mp != M or Np != n_real:
            y = y[:M, :n_real]
        return y, s, ss

    y = pl.pallas_call(
        _mm_kernel,
        out_shape=jax.ShapeDtypeStruct((Mp, Np), out_dtype),
        grid_spec=pltpu.PrefetchScalarGridSpec(
            num_scalar_prefetch=0, grid=grid,
            in_specs=in_specs,
            out_specs=pl.BlockSpec((tm, tn), lambda i, j, k: (i, j)),
            scratch_shapes=[pltpu.VMEM((tm, tn), jnp.float32)]),
        compiler_params=cparams,
    )(a, w)
    if Mp != M or Np != n_real:
        y = y[:M, :n_real]
    return y


def _bn_act_kernel(x_ref, s_ref, b_ref, *rest, relu, has_res):
    if has_res:
        res_ref, o_ref = rest
    else:
        (o_ref,) = rest
    x = x_ref[...].astype(jnp.float32)
    y = x * s_ref[...] + b_ref[...]
    if has_res:
        y = y + res_ref[...].astype(jnp.float32)
    if relu:
        y = jnp.maximum(y, 0.0)
    o_ref[...] = y.astype(o_ref.dtype)


def pallas_bn_act(x2d, scale, bias, residual=None, relu=True, out_dtype=ACT_DTYPE):
    """y = x * scale + bias (+residual)(+ReLU); scale/bias are per-channel f32."""
    R, C = x2d.shape
    tr = _pick_div(R, [2048, 1024, 512, 256, 128, 64, 32, 16])
    if tr is None:
        Rp = _round_up(R, 256)
        tr = 256
        x2d = jnp.pad(x2d, ((0, Rp - R), (0, 0)))
        if residual is not None:
            residual = jnp.pad(residual, ((0, Rp - R), (0, 0)))
    else:
        Rp = R
    ins = [x2d,
           scale.reshape(1, C).astype(jnp.float32),
           bias.reshape(1, C).astype(jnp.float32)]
    in_specs = [pl.BlockSpec((tr, C), lambda i: (i, 0)),
                pl.BlockSpec((1, C), lambda i: (0, 0)),
                pl.BlockSpec((1, C), lambda i: (0, 0))]
    has_res = residual is not None
    if has_res:
        ins.append(residual)
        in_specs.append(pl.BlockSpec((tr, C), lambda i: (i, 0)))
    out = pl.pallas_call(
        functools.partial(_bn_act_kernel, relu=relu, has_res=has_res),
        out_shape=jax.ShapeDtypeStruct((Rp, C), out_dtype),
        grid=(Rp // tr,),
        in_specs=in_specs,
        out_specs=pl.BlockSpec((tr, C), lambda i: (i, 0)),
        compiler_params=pltpu.CompilerParams(dimension_semantics=("parallel",)),
    )(*ins)
    return out[:R] if Rp != R else out


def _avgpool_kernel(x_ref, o_ref):
    o_ref[...] = jnp.mean(x_ref[...].astype(jnp.float32), axis=1, keepdims=True)


def pallas_global_avgpool(x):
    """AdaptiveAvgPool2d((1,1)) on NHWC -> (N, C) f32."""
    N, H, W, C = x.shape
    x3 = x.reshape(N, H * W, C)
    out = pl.pallas_call(
        _avgpool_kernel,
        out_shape=jax.ShapeDtypeStruct((N, 1, C), jnp.float32),
        grid=(N,),
        in_specs=[pl.BlockSpec((1, H * W, C), lambda i: (i, 0, 0))],
        out_specs=pl.BlockSpec((1, 1, C), lambda i: (i, 0, 0)),
        compiler_params=pltpu.CompilerParams(dimension_semantics=("parallel",)),
    )(x3)
    return out.reshape(N, C)


# ----------------------------------------------------------------------------
# Layer wrappers (im2col / window glue in plain JAX, compute in Pallas)
# ----------------------------------------------------------------------------
def conv2d(x, wp, stride, padding, *, with_stats=False, out_dtype=ACT_DTYPE):
    """x: NHWC bf16, wp: pre-padded weight dict. Conv via im2col + Pallas matmul."""
    N, H, W, C = x.shape
    kh, kw, cin, cout = wp['kh'], wp['kw'], wp['cin'], wp['cout']
    assert C == cin, (C, cin)
    OH = (H + 2 * padding - kh) // stride + 1
    OW = (W + 2 * padding - kw) // stride + 1
    x_p = jnp.pad(x, ((0, 0), (padding, padding), (padding, padding), (0, 0))) \
        if padding > 0 else x
    cols = []
    for ky in range(kh):
        for kx in range(kw):
            sl = jax.lax.slice(
                x_p, (0, ky, kx, 0),
                (N, ky + (OH - 1) * stride + 1, kx + (OW - 1) * stride + 1, C),
                (1, stride, stride, 1))
            cols.append(sl)
    K = kh * kw * cin
    Kp = wp['kp']
    if Kp > K:   # fold the K-padding into the single concat (no separate pad copy)
        cols.append(jnp.zeros((N, OH, OW, Kp - K), x.dtype))
    a = jnp.concatenate(cols, axis=-1).reshape(N * OH * OW, Kp)
    res = pallas_matmul(a, wp['w'], n_real=cout, with_stats=with_stats,
                        out_dtype=out_dtype)
    if with_stats:
        y, s, ss = res
        return y.reshape(N, OH, OW, cout), s, ss
    return res.reshape(N, OH, OW, cout)


def conv_bn(x, wp, stride, padding, bn, relu=True, residual=None):
    """Conv (stats fused into matmul epilogue) + train-mode BatchNorm (+res)(+ReLU)."""
    y, s, ss = conv2d(x, wp, stride, padding, with_stats=True)
    Nb, OH, OW, C = y.shape
    R = Nb * OH * OW
    mean = s / R
    var = jnp.maximum(ss / R - mean * mean, 0.0)          # clamp negative cancellation
    scale = bn['gamma'] * jax.lax.rsqrt(var + EPS)
    bias = bn['beta'] - mean * scale
    res2 = residual.reshape(R, C) if residual is not None else None
    out = pallas_bn_act(y.reshape(R, C), scale, bias, residual=res2, relu=relu)
    return out.reshape(Nb, OH, OW, C)


def maxpool_3x3_s2(x):
    """MaxPool 3x3/s2/p1 as a fused XLA maximum tree over 9 shifted strided slices
    (per perf review: avoids materializing a 9x window stack in HBM)."""
    N, H, W, C = x.shape
    OH = (H + 2 - 3) // 2 + 1
    OW = (W + 2 - 3) // 2 + 1
    x_p = jnp.pad(x, ((0, 0), (1, 1), (1, 1), (0, 0)),
                  constant_values=-jnp.inf)
    out = None
    for ky in range(3):
        for kx in range(3):
            sl = jax.lax.slice(
                x_p, (0, ky, kx, 0),
                (N, ky + (OH - 1) * 2 + 1, kx + (OW - 1) * 2 + 1, C),
                (1, 2, 2, 1))
            out = sl if out is None else jnp.maximum(out, sl)
    return out


def linear(x2d, p):
    M, K = x2d.shape
    Kp = p['w'].shape[0]
    if Kp != K:
        x2d = jnp.pad(x2d, ((0, 0), (0, Kp - K)))
    y = pallas_matmul(x2d, p['w'], n_real=p['n'], with_stats=False,
                      out_dtype=jnp.float32)
    return y + p['b'][None, :]


# ----------------------------------------------------------------------------
# Parameter init (deterministic; weights pre-reshaped/padded/cast to bf16)
# ----------------------------------------------------------------------------
class KeyGen:
    def __init__(self, seed):
        self.key = jax.random.PRNGKey(seed)

    def __call__(self):
        self.key, sub = jax.random.split(self.key)
        return sub


def init_conv(kg, kh, kw, cin, cout):
    # kaiming_normal_(mode='fan_out', nonlinearity='relu')
    fan_out = cout * kh * kw
    std = (2.0 / fan_out) ** 0.5
    w = jax.random.normal(kg(), (kh, kw, cin, cout), jnp.float32) * std
    K = kh * kw * cin
    Kp, Np = _kp_of(K), _np_of(cout)
    w2 = jnp.zeros((Kp, Np), jnp.float32).at[:K, :cout].set(w.reshape(K, cout))
    return {'w': w2.astype(jnp.bfloat16), 'kh': kh, 'kw': kw,
            'cin': cin, 'cout': cout, 'kp': Kp}


def init_bn(c):
    return {'gamma': jnp.ones((c,), jnp.float32),
            'beta': jnp.zeros((c,), jnp.float32)}


def init_linear(kg, cin, cout):
    bound = 1.0 / (cin ** 0.5)
    w = jax.random.uniform(kg(), (cin, cout), jnp.float32, -bound, bound)
    b = jax.random.uniform(kg(), (cout,), jnp.float32, -bound, bound)
    Kp, Np = _kp_of(cin), _np_of(cout)
    w2 = jnp.zeros((Kp, Np), jnp.float32).at[:cin, :cout].set(w)
    return {'w': w2.astype(jnp.bfloat16), 'b': b, 'n': cout}


def init_basic_block(kg, cin, cout, stride):
    p = {'conv1': init_conv(kg, 3, 3, cin, cout), 'bn1': init_bn(cout),
         'conv2': init_conv(kg, 3, 3, cout, cout), 'bn2': init_bn(cout),
         'stride': stride, 'downsample': None}
    if stride != 1 or cin != cout:
        p['downsample'] = {'conv': init_conv(kg, 1, 1, cin, cout),
                           'bn': init_bn(cout)}
    return p


def init_resnet(kg, blocks_num, num_classes):
    p = {'conv1': init_conv(kg, 7, 7, 3, 64), 'bn1': init_bn(64)}
    in_ch = 64
    for li, (ch, n, st) in enumerate(zip([64, 128, 256, 512], blocks_num,
                                         [1, 2, 2, 2])):
        blocks = [init_basic_block(kg, in_ch, ch, st)]
        in_ch = ch
        for _ in range(1, n):
            blocks.append(init_basic_block(kg, in_ch, ch, 1))
        p[f'layer{li + 1}'] = blocks
    p['fc'] = init_linear(kg, 512, num_classes)            # include_top
    return p


def init_resnet_ska(kg, blocks_num, num_classes):
    return {'res1': init_resnet(kg, blocks_num, num_classes),
            'res2': init_resnet(kg, blocks_num, num_classes),
            'fc': init_linear(kg, 4096, num_classes)}      # hardcoded 4096 in torch


def init_ska_three(kg, blocks_num, num_classes):
    return {'res1': init_resnet_ska(kg, blocks_num, num_classes),
            'res2': init_resnet_ska(kg, blocks_num, num_classes),
            'res3': init_resnet_ska(kg, blocks_num, num_classes),
            'fc': init_linear(kg, 512 * 3, num_classes)}


# ----------------------------------------------------------------------------
# Forward passes
# ----------------------------------------------------------------------------
def basic_block_forward(x, p):
    identity = x
    if p['downsample'] is not None:
        identity = conv_bn(x, p['downsample']['conv'], p['stride'], 0,
                           p['downsample']['bn'], relu=False)
    out = conv_bn(x, p['conv1'], p['stride'], 1, p['bn1'], relu=True)
    out = conv_bn(out, p['conv2'], 1, 1, p['bn2'], relu=True, residual=identity)
    return out


def resnet_forward(x, p):
    x = conv_bn(x, p['conv1'], 2, 3, p['bn1'], relu=True)
    x = maxpool_3x3_s2(x)
    for blk in p['layer1']:
        x = basic_block_forward(x, blk)
    for blk in p['layer2']:
        x = basic_block_forward(x, blk)
    for blk in p['layer3']:
        x = basic_block_forward(x, blk)
    x_last2 = basic_block_forward(x, p['layer4'][0])
    x_last2 = basic_block_forward(x_last2, p['layer4'][1])
    x_last = basic_block_forward(x_last2, p['layer4'][2])
    pooled = pallas_global_avgpool(x_last)                 # (N, 512) f32
    logits = linear(pooled, p['fc'])
    return x_last2, x_last, logits


def i1_coordinates(x_last, x_last2, size, original):
    # TODO(synk): `I1` is referenced but not defined in the PyTorch source; substituting
    # a deterministic attention-argmax bounding box (half-side = original // 4).
    attn = (jnp.mean(x_last.astype(jnp.float32), axis=-1)
            + jnp.mean(x_last2.astype(jnp.float32), axis=-1))   # (N, Hf, Wf)
    N, Hf, Wf = attn.shape
    idx = jnp.argmax(attn.reshape(N, -1), axis=-1)
    hi = (idx // Wf).astype(jnp.float32)
    wi = (idx % Wf).astype(jnp.float32)
    ch = (hi + 0.5) * (original / Hf)
    cw = (wi + 0.5) * (original / Wf)
    half = float(original // 4)
    x0 = jnp.clip(jnp.round(ch - half), 0, original - 1)
    x1 = jnp.clip(jnp.round(ch + half), 0, original - 1)
    y0 = jnp.clip(jnp.round(cw - half), 0, original - 1)
    y1 = jnp.clip(jnp.round(cw + half), 0, original - 1)
    return jnp.stack([x0, y0, x1, y1], axis=-1)            # (N, 4)


def _crop_resize_one(img, box, out_size):
    # Bilinear crop-resize, align_corners=True (plain-JAX glue: data-dependent gather).
    H, W, _ = img.shape
    x0, y0, x1, y1 = box[0], box[1], box[2], box[3]
    t = jnp.arange(out_size, dtype=jnp.float32) / (out_size - 1)
    src_r = x0 + t * (x1 - x0)
    src_c = y0 + t * (y1 - y0)
    r0 = jnp.clip(jnp.floor(src_r), 0, H - 1)
    c0 = jnp.clip(jnp.floor(src_c), 0, W - 1)
    r1 = jnp.clip(r0 + 1, 0, H - 1)
    c1 = jnp.clip(c0 + 1, 0, W - 1)
    ar = (src_r - r0)[:, None, None]
    ac = (src_c - c0)[None, :, None]
    r0i, r1i = r0.astype(jnp.int32), r1.astype(jnp.int32)
    c0i, c1i = c0.astype(jnp.int32), c1.astype(jnp.int32)
    imgf = img.astype(jnp.float32)
    v00 = imgf[r0i[:, None], c0i[None, :], :]
    v01 = imgf[r0i[:, None], c1i[None, :], :]
    v10 = imgf[r1i[:, None], c0i[None, :], :]
    v11 = imgf[r1i[:, None], c1i[None, :], :]
    top = v00 * (1 - ac) + v01 * ac
    bot = v10 * (1 - ac) + v11 * ac
    return top * (1 - ar) + bot * ar


def crop_resize(x, boxes, out_size):
    return jax.vmap(lambda img, box: _crop_resize_one(img, box, out_size))(x, boxes)


def resnet_ska_forward(x, p, size, original, resize_to):
    x_last2, x_last, x_linear1 = resnet_forward(x, p['res1'])
    boxes = i1_coordinates(x_last, x_last2, size, original)
    # TODO(synk): original module hardcodes the crop-resize target to 224x224; scaled
    # here to the (small) input spatial size to keep the demo shapes small.
    local = crop_resize(x, boxes, resize_to).astype(ACT_DTYPE)
    _, r2_x_last, _ = resnet_forward(local, p['res2'])
    x1 = pallas_global_avgpool(x_last)                     # (N, 512)
    x2 = pallas_global_avgpool(r2_x_last)                  # (N, 512)
    xcat = jnp.concatenate([x1, x2], axis=1)               # (N, 1024)
    flat = xcat.reshape(1, -1)                             # torch.flatten(x): N*1024 == 4096
    xfc = linear(flat, p['fc'])[0]
    return x_linear1, xfc, r2_x_last


def ska_three_forward(x1, x2, x3, params, size, original, resize_to):
    l1, _, a1 = resnet_ska_forward(x1, params['res1'], size, original, resize_to)
    p1 = pallas_global_avgpool(a1)
    l2, _, a2 = resnet_ska_forward(x2, params['res2'], size, original, resize_to)
    p2 = pallas_global_avgpool(a2)
    l3, _, a3 = resnet_ska_forward(x3, params['res3'], size, original, resize_to)
    p3 = pallas_global_avgpool(a3)
    xcat = jnp.concatenate([p1, p2, p3], axis=1)           # (N, 1536)
    out = linear(xcat, params['fc'])
    return l1, l2, l3, out


# ----------------------------------------------------------------------------
if __name__ == "__main__":
    B, S = 4, 64           # batch MUST be 4: ResNet_SKA's Linear(4096) acts on a B*1024 flat vec
    NUM_CLASSES = 10
    BLOCKS = [1, 1, 1, 3]  # layer4 must have >= 3 blocks (forward indexes [0],[1],[2])

    key = jax.random.PRNGKey(0)
    k1, k2, k3 = jax.random.split(key, 3)
    x1 = jax.random.normal(k1, (B, 3, S, S), jnp.float32)   # NCHW like PyTorch
    x2 = jax.random.normal(k2, (B, 3, S, S), jnp.float32)
    x3 = jax.random.normal(k3, (B, 3, S, S), jnp.float32)

    params = init_ska_three(KeyGen(42), BLOCKS, NUM_CLASSES)

    to_nhwc = lambda t: jnp.transpose(t, (0, 2, 3, 1)).astype(ACT_DTYPE)
    outs = ska_three_forward(to_nhwc(x1), to_nhwc(x2), to_nhwc(x3), params,
                             size=7, original=S, resize_to=S)
    outs = jax.block_until_ready(outs)
    # outs = (x1_linear (4,10), x2_linear (4,10), x3_linear (4,10), fused logits (4,10))
    print("KERNEL_OK")
</pallas_src>

<mosaic_0001>
module attributes {stable_mosaic.version = 11 : i64} {
  func.func @_mm_stats_kernel(%arg0: i32, %arg1: i32, %arg2: i32, %arg3: memref<128x256xbf16, #tpu.memory_space<vmem>>, %arg4: memref<256x64xbf16, #tpu.memory_space<vmem>>, %arg5: memref<128x64xbf16, #tpu.memory_space<vmem>>, %arg6: memref<8x64xf32, #tpu.memory_space<vmem>>, %arg7: memref<128x64xf32, #tpu.memory_space<vmem>>) attributes {dimension_semantics = [#tpu.dimension_semantics<parallel>, #tpu.dimension_semantics<parallel>, #tpu.dimension_semantics<arbitrary>], iteration_bounds = array<i64: 32, 1, 1>, scalar_prefetch = 0 : i64, scratch_operands = 1 : i64, tpu.core_type = #tpu.core_type<tc>, window_params = [{transform_indices = @transform_0, window_bounds = array<i64: 128, 256>}, {transform_indices = @transform_1, window_bounds = array<i64: 256, 64>}, {transform_indices = @transform_2, window_bounds = array<i64: 128, 64>}, {transform_indices = @transform_3, window_bounds = array<i64: 8, 64>}]} {
    %c0_i32 = arith.constant 0 : i32
    %0 = arith.cmpi eq, %arg2, %c0_i32 : i32
    %1 = arith.extui %0 : i1 to i32
    %c0_i32_0 = arith.constant 0 : i32
    %2 = arith.cmpi ne, %1, %c0_i32_0 : i32
    scf.if %2 {
      %cst_10 = arith.constant 0.000000e+00 : f32
      %12 = vector.broadcast %cst_10 : f32 to vector<128x64xf32>
      %c0_11 = arith.constant 0 : index
      %c0_12 = arith.constant 0 : index
      %13 = vector.load %arg7[%c0_11, %c0_12] : memref<128x64xf32, #tpu.memory_space<vmem>>, vector<128x64xf32>
      tpu.vector_store %arg7[%c0_11, %c0_12], %12 {strides = array<i32>} : memref<128x64xf32, #tpu.memory_space<vmem>>, vector<128x64xf32>,
    } else {
    }
    %c0 = arith.constant 0 : index
    %c0_1 = arith.constant 0 : index
    %3 = vector.load %arg7[%c0, %c0_1] : memref<128x64xf32, #tpu.memory_space<vmem>>, vector<128x64xf32>
    %c0_2 = arith.constant 0 : index
    %c0_3 = arith.constant 0 : index
    %4 = vector.load %arg3[%c0_2, %c0_3] : memref<128x256xbf16, #tpu.memory_space<vmem>>, vector<128x256xbf16>
    %c0_4 = arith.constant 0 : index
    %c0_5 = arith.constant 0 : index
    %5 = vector.load %arg4[%c0_4, %c0_5] : memref<256x64xbf16, #tpu.memory_space<vmem>>, vector<256x64xbf16>
    %cst = arith.constant dense<0.000000e+00> : vector<128x64xf32>
    %6 = tpu.matmul %4, %5, %cst {dimension_numbers = #tpu.dot_dimension_numbers<[1], [0], [0], [1], [0, 0, 1, 1], [], []>} : vector<128x256xbf16>, vector<256x64xbf16>, vector<128x64xf32> -> vector<128x64xf32>
    %7 = arith.addf %3, %6 : vector<128x64xf32>
    %c0_6 = arith.constant 0 : index
    %c0_7 = arith.constant 0 : index
    %8 = vector.load %arg7[%c0_6, %c0_7] : memref<128x64xf32, #tpu.memory_space<vmem>>, vector<128x64xf32>
    tpu.vector_store %arg7[%c0_6, %c0_7], %7 {strides = array<i32>} : memref<128x64xf32, #tpu.memory_space<vmem>>, vector<128x64xf32>,
    %c0_i32_8 = arith.constant 0 : i32
    %9 = arith.cmpi eq, %arg2, %c0_i32_8 : i32
    %10 = arith.extui %9 : i1 to i32
    %c0_i32_9 = arith.constant 0 : i32
    %11 = arith.cmpi ne, %10, %c0_i32_9 : i32
    scf.if %11 {
      %c0_10 = arith.constant 0 : index
      %c0_11 = arith.constant 0 : index
      %12 = vector.load %arg7[%c0_10, %c0_11] : memref<128x64xf32, #tpu.memory_space<vmem>>, vector<128x64xf32>
      %13 = arith.truncf %12 : vector<128x64xf32> to vector<128x64xbf16>
      %c0_12 = arith.constant 0 : index
      %c0_13 = arith.constant 0 : index
      %14 = vector.load %arg5[%c0_12, %c0_13] : memref<128x64xbf16, #tpu.memory_space<vmem>>, vector<128x64xbf16>
      tpu.vector_store %arg5[%c0_12, %c0_13], %13 {strides = array<i32>} : memref<128x64xbf16, #tpu.memory_space<vmem>>, vector<128x64xbf16>,
      %cst_14 = arith.constant dense<0.000000e+00> : vector<64xf32>
      %15 = vector.multi_reduction <add>, %12, %cst_14 [0] : vector<128x64xf32> to vector<64xf32>
      %16 = vector.shape_cast %15 : vector<64xf32> to vector<1x64xf32>
      %c0_15 = arith.constant 0 : index
      %c0_16 = arith.constant 0 : index
      %17 = vector.load %arg6[%c0_15, %c0_16] : memref<8x64xf32, #tpu.memory_space<vmem>>, vector<1x64xf32>
      tpu.vector_store %arg6[%c0_15, %c0_16], %16 {strides = array<i32>} : memref<8x64xf32, #tpu.memory_space<vmem>>, vector<1x64xf32>,
      %18 = arith.mulf %12, %12 : vector<128x64xf32>
      %cst_17 = arith.constant dense<0.000000e+00> : vector<64xf32>
      %19 = vector.multi_reduction <add>, %18, %cst_17 [0] : vector<128x64xf32> to vector<64xf32>
      %20 = vector.shape_cast %19 : vector<64xf32> to vector<1x64xf32>
      %c1 = arith.constant 1 : index
      %c0_18 = arith.constant 0 : index
      %21 = vector.load %arg6[%c1, %c0_18] : memref<8x64xf32, #tpu.memory_space<vmem>>, vector<1x64xf32>
      tpu.vector_store %arg6[%c1, %c0_18], %20 {strides = array<i32>} : memref<8x64xf32, #tpu.memory_space<vmem>>, vector<1x64xf32>,
    } else {
    }
    return
  }
  func.func @transform_0(%arg0: i32, %arg1: i32, %arg2: i32) -> (i32, i32) {
    %c0_i32 = arith.constant 0 : i32
    return %arg0, %arg2 : i32, i32
  }
  func.func @transform_1(%arg0: i32, %arg1: i32, %arg2: i32) -> (i32, i32) {
    %c0_i32 = arith.constant 0 : i32
    return %arg2, %arg1 : i32, i32
  }
  func.func @transform_2(%arg0: i32, %arg1: i32, %arg2: i32) -> (i32, i32) {
    %c0_i32 = arith.constant 0 : i32
    return %arg0, %arg1 : i32, i32
  }
  func.func @transform_3(%arg0: i32, %arg1: i32, %arg2: i32) -> (i32, i32) {
    %c0_i32 = arith.constant 0 : i32
    return %arg0, %arg1 : i32, i32
  }
}

</mosaic_0001>

<llo_original>
// kernel: tpu_custom_call.1
$region0: #{tpu_custom_call.1}
  #allocation0 [shape = 'u32[]', space=smem, size = 0x4, offset = 0x4, fixed_abs, tag = 'smem constant byte address 0x4 - core index']
  #allocation1 [shape = 'u32[144,128]{1,0:T(1,128)}', space=vmem, size = 0x12000, scoped, tag = 'internal scratch']
  #allocation2 [shape = 'f32[128,64]{1,0:T(8,128)}', space=vmem, size = 0x10000, scoped, tag = 'scratch operand']
  %s0 = inlined_call_operand.hbm [shape: bf16[4096,256], index: 0, kind: input, shape index: {}]
  %s1 = inlined_call_operand.vmem [shape: bf16[256,64], index: 1, kind: input, shape index: {}]
  %s2 = inlined_call_operand.vmem [shape: bf16[4096,64], index: 2, kind: output, shape index: {0}]
  %s3 = inlined_call_operand.vmem [shape: f32[256,64], index: 3, kind: output, shape index: {1}]
  %4 = xla_tuple %s2, %s3
  %s5 = sld [smem:[#allocation0]]
  $region61: #{tpu_custom_call.1} parent=0
    _
  %s7 = ssub.s32 1, %s5
  %s8 = scalar_select 0, %s7, %s5
  $region1: #{tpu_custom_call.1} parent=0
    #allocation3 [shape = 'u8[131072]{0}', space=vmem, size = 0x20000, scoped, tag = 'input window, operand 0']
    #allocation4 [shape = 's32[2]{0}', space=sflag, size = 0x8, scoped, tag = 'scoped memory for tpu_custom_call.1']
    %9 = vsyncpa [#allocation4], 0
    %s10 = scalar_lea.sflag [#allocation4], 1
    %11 = vsyncpa %s10, 0
    loop: start=0, step=1, limit=34
    $region2: #{tpu_custom_call.1} parent=1 // loop_pre_header
      _
    $region3: #{tpu_custom_call.1} parent=1 // loop_header
      %s13 = sphi 0, %s17
      %p14 = scmp.ge.s32.totalorder %s13, 34
      %s20 = sphi 0, %s39
      %s21 = sphi 0, %s35
      %s22 = sphi 0, %s31
      %s23 = sphi 0, %s20
      %s24 = sphi 0, %s21
      %s25 = sphi 0, %s22
      %s26 = sphi 0, %s23
      %s27 = sphi 0, %s24
      %s28 = sphi 0, %s25
      %s44 = sphi 0, %s46
      %s47 = sphi 0, %s44
      %s48 = sphi 0, %s47
      %s64 = sphi 0, %s48
      %s72 = sphi 0, %s74
      %s75 = sphi 0, %s72
      %s76 = sphi 0, %s75
      %s92 = sphi 0, %s76
      %s100 = sphi 0, %s102
      %s103 = sphi 0, %s100
      %s104 = sphi 0, %s103
      %s120 = sphi 0, %s104
      %s128 = sphi 0, %s130
      %s131 = sphi 0, %s128
      %s132 = sphi 0, %s131
      %s148 = sphi 0, %s132
    $region4: #{tpu_custom_call.1} parent=1 // loop_header_branch
      %16 = sbr.rel (%p14) target = $region8
    $region5: #{tpu_custom_call.1} parent=1 // loop_body
      %s18 = ssub.s32 %s13, 1
      %s19 = ssub.s32 %s13, 2
      %s29 = sadd.s32 1, %s22
      %p30 = scmp.ge.s32.totalorder %s29, 1
      %s31 = scalar_select %p30, 0, %s29
      %s32 = sadd.s32 1, %s21
      %s33 = scalar_select %p30, %s32, %s21
      %p34 = scmp.ge.s32.totalorder %s33, 1
      %s35 = scalar_select %p34, 0, %s33
      %s36 = sadd.s32 1, %s20
      %s37 = scalar_select %p34, %s36, %s20
      %p38 = scmp.ge.s32.totalorder %s37, 32
      %s39 = scalar_select %p38, 0, %s37
      %s40 = ssub.s32 %s20, %s39
      %s41 = ssub.s32 %s22, %s31
      %s42 = sor.u32 %s40, %s41
      %p43 = scmp.eq.s32.totalorder %s42, 0
      %s45 = sadd.s32 %s44, 1
      %s46 = scalar_select %p43, %s44, %s45
      %p49 = pneg %p43
      %p50 = scmp.eq.s32.totalorder %s13, 31
      %p51 = por %p49, %p50
      %p52 = scmp.ne.s32.totalorder %s44, %s47
      %p53 = scmp.eq.s32.totalorder %s13, 0
      %p54 = por %p52, %p53
      %p55 = scmp.ne.s32.totalorder %s44, %s47
      %p56 = scmp.eq.s32.totalorder %s18, 31
      %p57 = por %p55, %p56
      %p58 = scmp.ne.s32.totalorder %s47, %s48
      %p59 = scmp.eq.s32.totalorder %s18, 0
      %p60 = por %p58, %p59
      %p61 = scmp.ne.s32.totalorder %s47, %s48
      %p62 = scmp.eq.s32.totalorder %s19, 31
      %p63 = por %p61, %p62
      %p65 = scmp.ne.s32.totalorder %s48, %s64
      %p66 = scmp.eq.s32.totalorder %s19, 0
      %p67 = por %p65, %p66
      %s68 = ssub.s32 %s22, %s31
      %s69 = ssub.s32 %s21, %s35
      %s70 = sor.u32 %s68, %s69
      %p71 = scmp.eq.s32.totalorder %s70, 0
      %s73 = sadd.s32 %s72, 1
      %s74 = scalar_select %p71, %s72, %s73
      %p77 = pneg %p71
      %p78 = scmp.eq.s32.totalorder %s13, 31
      %p79 = por %p77, %p78
      %p80 = scmp.ne.s32.totalorder %s72, %s75
      %p81 = scmp.eq.s32.totalorder %s13, 0
      %p82 = por %p80, %p81
      %p83 = scmp.ne.s32.totalorder %s72, %s75
      %p84 = scmp.eq.s32.totalorder %s18, 31
      %p85 = por %p83, %p84
      %p86 = scmp.ne.s32.totalorder %s75, %s76
      %p87 = scmp.eq.s32.totalorder %s18, 0
      %p88 = por %p86, %p87
      %p89 = scmp.ne.s32.totalorder %s75, %s76
      %p90 = scmp.eq.s32.totalorder %s19, 31
      %p91 = por %p89, %p90
      %p93 = scmp.ne.s32.totalorder %s76, %s92
      %p94 = scmp.eq.s32.totalorder %s19, 0
      %p95 = por %p93, %p94
      %s96 = ssub.s32 %s20, %s39
      %s97 = ssub.s32 %s21, %s35
      %s98 = sor.u32 %s96, %s97
      %p99 = scmp.eq.s32.totalorder %s98, 0
      %s101 = sadd.s32 %s100, 1
      %s102 = scalar_select %p99, %s100, %s101
      %p105 = pneg %p99
      %p106 = scmp.eq.s32.totalorder %s13, 31
      %p107 = por %p105, %p106
      %p108 = scmp.ne.s32.totalorder %s100, %s103
      %p109 = scmp.eq.s32.totalorder %s13, 0
      %p110 = por %p108, %p109
      %p111 = scmp.ne.s32.totalorder %s100, %s103
      %p112 = scmp.eq.s32.totalorder %s18, 31
      %p113 = por %p111, %p112
      %p114 = scmp.ne.s32.totalorder %s103, %s104
      %p115 = scmp.eq.s32.totalorder %s18, 0
      %p116 = por %p114, %p115
      %p117 = scmp.ne.s32.totalorder %s103, %s104
      %p118 = scmp.eq.s32.totalorder %s19, 31
      %p119 = por %p117, %p118
      %p121 = scmp.ne.s32.totalorder %s104, %s120
      %p122 = scmp.eq.s32.totalorder %s19, 0
      %p123 = por %p121, %p122
      %s124 = ssub.s32 %s20, %s39
      %s125 = ssub.s32 %s21, %s35
      %s126 = sor.u32 %s124, %s125
      %p127 = scmp.eq.s32.totalorder %s126, 0
      %s129 = sadd.s32 %s128, 1
      %s130 = scalar_select %p127, %s128, %s129
      %p133 = pneg %p127
      %p134 = scmp.eq.s32.totalorder %s13, 31
      %p135 = por %p133, %p134
      %p136 = scmp.ne.s32.totalorder %s128, %s131
      %p137 = scmp.eq.s32.totalorder %s13, 0
      %p138 = por %p136, %p137
      %p139 = scmp.ne.s32.totalorder %s128, %s131
      %p140 = scmp.eq.s32.totalorder %s18, 31
      %p141 = por %p139, %p140
      %p142 = scmp.ne.s32.totalorder %s131, %s132
      %p143 = scmp.eq.s32.totalorder %s18, 0
      %p144 = por %p142, %p143
      %p145 = scmp.ne.s32.totalorder %s131, %s132
      %p146 = scmp.eq.s32.totalorder %s19, 31
      %p147 = por %p145, %p146
      %p149 = scmp.ne.s32.totalorder %s132, %s148
      %p150 = scmp.eq.s32.totalorder %s19, 0
      %p151 = por %p149, %p150
      %p152 = scmp.le.s32.totalorder 1, %s13
      %p153 = scmp.lt.s32.totalorder %s13, 33
      %p154 = pnand %p152, %p153
      %p155 = pneg %p154
      // Predicated region
      $region9: #{tpu_custom_call.1} parent=5 // pred_check
        _
      $region10: #{tpu_custom_call.1} parent=5 // pred_check_branch
        %157 = sbr.rel (%p154) target = $region12
      $region11: #{tpu_custom_call.1} parent=5 // pred_region
        %s158 = ssub.s32 %s13, 1
        // Predicated region
        $region13: #{tpu_custom_call.1} parent=11 // pred_check
          %p159 = pneg %p88
        $region14: #{tpu_custom_call.1} parent=11 // pred_check_branch
          %161 = sbr.rel (%p159) target = $region16
        $region15: #{tpu_custom_call.1} parent=11 // pred_region
          %s162 = smul.u32 32, %s25
          %p163 = scmp.lt.s32.totalorder %s162, 31
          %s164 = scalar_select %p163, %s162, 31
          %p165 = scmp.lt.s32.totalorder %s24, 0
          %s166 = scalar_select %p165, %s24, 0
          %s167 = sadd.s32 %s166, %s164
          %s168 = smul.addr %s167, 4
          %s169 = scalar_lea.vmem %s1, %s168
          %s170 = smul.u32 32, %s25
        $region16: #{tpu_custom_call.1} parent=11 // pred_fallthru
          _
      $region12: #{tpu_custom_call.1} parent=5 // pred_fallthru
        _
      %p171 = scmp.lt.s32.totalorder %s13, 32
      // Predicated region
      $region17: #{tpu_custom_call.1} parent=5 // pred_check
        %p172 = pneg %p171
      $region18: #{tpu_custom_call.1} parent=5 // pred_check_branch
        %174 = sbr.rel (%p172) target = $region20
      $region19: #{tpu_custom_call.1} parent=5 // pred_region
        // Predicated region
        $region21: #{tpu_custom_call.1} parent=19 // pred_check
          %p175 = pneg %p54
        $region22: #{tpu_custom_call.1} parent=19 // pred_check_branch
          %177 = sbr.rel (%p175) target = $region24
        $region23: #{tpu_custom_call.1} parent=19 // pred_region
          %s178 = sand.u32 %s44, 1
          %s179 = scalar_lea.sflag [#allocation4], %s178
          %s180 = sand.u32 %s44, 1
          %s181 = smul.addr %s180, 128
          %s182 = scalar_lea.vmem [#allocation3], %s181
          %s183 = smul.u32 16, %s20
          %s184 = smul.u32 2, %s22
          %s186 = ssub.s32 2048, 2048
          %187 = vsyncadd %s179, %s186
          %s188 = smul.addr %s183, 2
          %s189 = sadd.s32 %s184, %s188
          %s190 = smul.addr %s189, 64
          %s191 = scalar_lea.hbm %s0, %s190
          %s192 = sshll.u32 %s182, 4
          %s193 = int_to_ptr.vmem [resolvable:$true] %s192
          %198 = dma.hbm_to_vmem [thread:$0]  %s191, 2048, %s193, %s179, 128, 128, 8
        $region24: #{tpu_custom_call.1} parent=19 // pred_fallthru
          _
      $region20: #{tpu_custom_call.1} parent=5 // pred_fallthru
        _
      %p199 = scmp.le.s32.totalorder 1, %s13
      %p200 = scmp.lt.s32.totalorder %s13, 33
      %p201 = pnand %p199, %p200
      %p202 = pneg %p201
      // Predicated region
      $region25: #{tpu_custom_call.1} parent=5 // pred_check
        _
      $region26: #{tpu_custom_call.1} parent=5 // pred_check_branch
        %204 = sbr.rel (%p201) target = $region28
      $region27: #{tpu_custom_call.1} parent=5 // pred_region
        %s205 = ssub.s32 %s13, 1
        %s206 = sand.u32 %s47, 1
        %s207 = scalar_lea.sflag [#allocation4], %s206
        %s208 = sand.u32 %s47, 1
        %s209 = smul.addr %s208, 128
        %s210 = scalar_lea.vmem [#allocation3], %s209
        // Predicated region
        $region29: #{tpu_custom_call.1} parent=27 // pred_check
          %p211 = pneg %p60
        $region30: #{tpu_custom_call.1} parent=27 // pred_check_branch
          %213 = sbr.rel (%p211) target = $region32
        $region31: #{tpu_custom_call.1} parent=27 // pred_region
          %214 = dma.done %s207, 2048
        $region32: #{tpu_custom_call.1} parent=27 // pred_fallthru
          _
        %s215 = sand.u32 %s47, 1
        %s216 = scalar_lea.sflag [#allocation4], %s215
        %s217 = sand.u32 %s47, 1
        %s218 = smul.addr %s217, 128
        %s219 = scalar_lea.vmem [#allocation3], %s218
        %p220 = pneg %p60
        %p221 = pneg %p57
        %s222 = smul.u32 32, %s25
        %p223 = scmp.lt.s32.totalorder %s222, 31
        %s224 = scalar_select %p223, %s222, 31
        %p225 = scmp.lt.s32.totalorder %s24, 0
        %s226 = scalar_select %p225, %s24, 0
        %s227 = sadd.s32 %s226, %s224
        %s228 = smul.addr %s227, 4
        %s229 = scalar_lea.vmem %s1, %s228
        %p230 = pneg %p88
        %p231 = pneg %p85
        %p232 = pneg %p116
        %p233 = pneg %p113
        %s234 = smul.u32 16, %s23
        %p235 = scmp.lt.s32.totalorder %s234, 511
        %s236 = scalar_select %p235, %s234, 511
        %p237 = scmp.lt.s32.totalorder %s24, 0
        %s238 = scalar_select %p237, %s24, 0
        %s239 = sadd.s32 %s238, %s236
        %s240 = smul.addr %s239, 4
        %s241 = scalar_lea.vmem %s2, %s240
        %p242 = pneg %p144
        %p243 = pneg %p141
        %p244 = scmp.lt.s32.totalorder %s23, 31
        %s245 = scalar_select %p244, %s23, 31
        %p246 = scmp.lt.s32.totalorder %s24, 0
        %s247 = scalar_select %p246, %s24, 0
        %s248 = sadd.s32 %s247, %s245
        %s249 = smul.addr %s248, 8
        %s250 = scalar_lea.vmem %s3, %s249
        %s251 = smul.u32 16, %s23
        %s252 = smul.u32 2, %s25
        %s253 = smul.u32 32, %s25
        %p254 = scmp.lt.s32.totalorder %s253, 31
        %s255 = scalar_select %p254, %s253, 31
        %p256 = scmp.lt.s32.totalorder %s24, 0
        %s257 = scalar_select %p256, %s24, 0
        %s258 = sadd.s32 %s257, %s255
        %s259 = smul.addr %s258, 4
        %s260 = scalar_lea.vmem %s1, %s259
        %s261 = smul.u32 32, %s25
        %s262 = smul.u32 16, %s23
        %p263 = scmp.lt.s32.totalorder %s262, 511
        %s264 = scalar_select %p263, %s262, 511
        %p265 = scmp.lt.s32.totalorder %s24, 0
        %s266 = scalar_select %p265, %s24, 0
        %s267 = sadd.s32 %s266, %s264
        %s268 = smul.addr %s267, 4
        %s269 = scalar_lea.vmem %s2, %s268
        %s270 = smul.u32 16, %s23
        %p271 = scmp.lt.s32.totalorder %s23, 31
        %s272 = scalar_select %p271, %s23, 31
        %p273 = scmp.lt.s32.totalorder %s24, 0
        %s274 = scalar_select %p273, %s24, 0
        %s275 = sadd.s32 %s274, %s272
        %s276 = smul.addr %s275, 8
        %s277 = scalar_lea.vmem %s3, %s276
        %p279 = scmp.eq.s32.totalorder %s25, 0
        // Predicated region
        $region33: #{tpu_custom_call.1} parent=27 // pred_check
          %p280 = pneg %p279
        $region34: #{tpu_custom_call.1} parent=27 // pred_check_branch
          %282 = sbr.rel (%p280) target = $region36
        $region35: #{tpu_custom_call.1} parent=27 // pred_region
          %vm283 = vcmask 523264
          %284 = vst.msk [vmem:[#allocation2] sm:$0xff] %vm283, 0.0
          %285 = vst.msk [vmem:[#allocation2 + $0x8] sm:$0xff] %vm283, 0.0
          %286 = vst.msk [vmem:[#allocation2 + $0x10] sm:$0xff] %vm283, 0.0
          %287 = vst.msk [vmem:[#allocation2 + $0x18] sm:$0xff] %vm283, 0.0
          %288 = vst.msk [vmem:[#allocation2 + $0x20] sm:$0xff] %vm283, 0.0
          %289 = vst.msk [vmem:[#allocation2 + $0x28] sm:$0xff] %vm283, 0.0
          %290 = vst.msk [vmem:[#allocation2 + $0x30] sm:$0xff] %vm283, 0.0
          %291 = vst.msk [vmem:[#allocation2 + $0x38] sm:$0xff] %vm283, 0.0
          %292 = vst.msk [vmem:[#allocation2 + $0x40] sm:$0xff] %vm283, 0.0
          %293 = vst.msk [vmem:[#allocation2 + $0x48] sm:$0xff] %vm283, 0.0
          %294 = vst.msk [vmem:[#allocation2 + $0x50] sm:$0xff] %vm283, 0.0
          %295 = vst.msk [vmem:[#allocation2 + $0x58] sm:$0xff] %vm283, 0.0
          %296 = vst.msk [vmem:[#allocation2 + $0x60] sm:$0xff] %vm283, 0.0
          %297 = vst.msk [vmem:[#allocation2 + $0x68] sm:$0xff] %vm283, 0.0
          %298 = vst.msk [vmem:[#allocation2 + $0x70] sm:$0xff] %vm283, 0.0
          %299 = vst.msk [vmem:[#allocation2 + $0x78] sm:$0xff] %vm283, 0.0
        $region36: #{tpu_custom_call.1} parent=27 // pred_fallthru
          _
        %v300 = vld [vmem:[#allocation2] sm:$0xff]
        %v301 = vld [vmem:[#allocation2 + $0x8] sm:$0xff]
        %v302 = vld [vmem:[#allocation2 + $0x10] sm:$0xff]
        %v303 = vld [vmem:[#allocation2 + $0x18] sm:$0xff]
        %v304 = vld [vmem:[#allocation2 + $0x20] sm:$0xff]
        %v305 = vld [vmem:[#allocation2 + $0x28] sm:$0xff]
        %v306 = vld [vmem:[#allocation2 + $0x30] sm:$0xff]
        %v307 = vld [vmem:[#allocation2 + $0x38] sm:$0xff]
        %v308 = vld [vmem:[#allocation2 + $0x40] sm:$0xff]
        %v309 = vld [vmem:[#allocation2 + $0x48] sm:$0xff]
        %v310 = vld [vmem:[#allocation2 + $0x50] sm:$0xff]
        %v311 = vld [vmem:[#allocation2 + $0x58] sm:$0xff]
        %v312 = vld [vmem:[#allocation2 + $0x60] sm:$0xff]
        %v313 = vld [vmem:[#allocation2 + $0x68] sm:$0xff]
        %v314 = vld [vmem:[#allocation2 + $0x70] sm:$0xff]
        %v315 = vld [vmem:[#allocation2 + $0x78] sm:$0xff]
        %v316 = vld [vmem:[%s210] sm:$0xff]
        %v317 = vld [vmem:[%s210 + $0x8] sm:$0xff]
        %v318 = vld [vmem:[%s210 + $0x10] sm:$0xff]
        %v319 = vld [vmem:[%s210 + $0x18] sm:$0xff]
        %v320 = vld [vmem:[%s210 + $0x20] sm:$0xff]
        %v321 = vld [vmem:[%s210 + $0x28] sm:$0xff]
        %v322 = vld [vmem:[%s210 + $0x30] sm:$0xff]
        %v323 = vld [vmem:[%s210 + $0x38] sm:$0xff]
        %v324 = vld [vmem:[%s210 + $0x40] sm:$0xff]
        %v325 = vld [vmem:[%s210 + $0x48] sm:$0xff]
        %v326 = vld [vmem:[%s210 + $0x50] sm:$0xff]
        %v327 = vld [vmem:[%s210 + $0x58] sm:$0xff]
        %v328 = vld [vmem:[%s210 + $0x60] sm:$0xff]
        %v329 = vld [vmem:[%s210 + $0x68] sm:$0xff]
        %v330 = vld [vmem:[%s210 + $0x70] sm:$0xff]
        %v331 = vld [vmem:[%s210 + $0x78] sm:$0xff]
        %v332 = vld [vmem:[%s260] sm:$0xf]
        %v333 = vld [vmem:[%s260 + $0x4] sm:$0xf]
        %v334 = vld [vmem:[%s260 + $0x8] sm:$0xf]
        %v335 = vld [vmem:[%s260 + $0xc] sm:$0xf]
        %v336 = vld [vmem:[%s260 + $0x10] sm:$0xf]
        %v337 = vld [vmem:[%s260 + $0x14] sm:$0xf]
        %v338 = vld [vmem:[%s260 + $0x18] sm:$0xf]
        %v339 = vld [vmem:[%s260 + $0x1c] sm:$0xf]
        %v340 = vld [vmem:[%s260 + $0x20] sm:$0xf]
        %v341 = vld [vmem:[%s260 + $0x24] sm:$0xf]
        %v342 = vld [vmem:[%s260 + $0x28] sm:$0xf]
        %v343 = vld [vmem:[%s260 + $0x2c] sm:$0xf]
        %v344 = vld [vmem:[%s260 + $0x30] sm:$0xf]
        %v345 = vld [vmem:[%s260 + $0x34] sm:$0xf]
        %v346 = vld [vmem:[%s260 + $0x38] sm:$0xf]
        %v347 = vld [vmem:[%s260 + $0x3c] sm:$0xf]
        %v348 = vld [vmem:[%s260 + $0x40] sm:$0xf]
        %v349 = vld [vmem:[%s260 + $0x44] sm:$0xf]
        %v350 = vld [vmem:[%s260 + $0x48] sm:$0xf]
        %v351 = vld [vmem:[%s260 + $0x4c] sm:$0xf]
        %v352 = vld [vmem:[%s260 + $0x50] sm:$0xf]
        %v353 = vld [vmem:[%s260 + $0x54] sm:$0xf]
        %v354 = vld [vmem:[%s260 + $0x58] sm:$0xf]
        %v355 = vld [vmem:[%s260 + $0x5c] sm:$0xf]
        %v356 = vld [vmem:[%s260 + $0x60] sm:$0xf]
        %v357 = vld [vmem:[%s260 + $0x64] sm:$0xf]
        %v358 = vld [vmem:[%s260 + $0x68] sm:$0xf]
        %v359 = vld [vmem:[%s260 + $0x6c] sm:$0xf]
        %v360 = vld [vmem:[%s260 + $0x70] sm:$0xf]
        %v361 = vld [vmem:[%s260 + $0x74] sm:$0xf]
        %v362 = vld [vmem:[%s260 + $0x78] sm:$0xf]
        %v363 = vld [vmem:[%s260 + $0x7c] sm:$0xf]
        %v380 = vunpack.c.l.b16 %v316
        %v381 = vunpack.c.h.b16 %v316
        %v382 = vunpack.c.l.b16 %v317
        %v383 = vunpack.c.h.b16 %v317
        %v384 = vunpack.c.l.b16 %v318
        %v385 = vunpack.c.h.b16 %v318
        %v386 = vunpack.c.l.b16 %v319
        %v387 = vunpack.c.h.b16 %v319
        %v388 = vunpack.c.l.b16 %v320
        %v389 = vunpack.c.h.b16 %v320
        %v390 = vunpack.c.l.b16 %v321
        %v391 = vunpack.c.h.b16 %v321
        %v392 = vunpack.c.l.b16 %v322
        %v393 = vunpack.c.h.b16 %v322
        %v394 = vunpack.c.l.b16 %v323
        %v395 = vunpack.c.h.b16 %v323
        %v396 = vunpack.c.l.b16 %v324
        %v397 = vunpack.c.h.b16 %v324
        %v398 = vunpack.c.l.b16 %v325
        %v399 = vunpack.c.h.b16 %v325
        %v400 = vunpack.c.l.b16 %v326
        %v401 = vunpack.c.h.b16 %v326
        %v402 = vunpack.c.l.b16 %v327
        %v403 = vunpack.c.h.b16 %v327
        %v404 = vunpack.c.l.b16 %v328
        %v405 = vunpack.c.h.b16 %v328
        %v406 = vunpack.c.l.b16 %v329
        %v407 = vunpack.c.h.b16 %v329
        %v408 = vunpack.c.l.b16 %v330
        %v409 = vunpack.c.h.b16 %v330
        %v410 = vunpack.c.l.b16 %v331
        %v411 = vunpack.c.h.b16 %v331
        %v412 = vpack.c.b16 %v382, %v380
        %v413 = vpack.c.b16 %v383, %v381
        %v414 = vpack.c.b16 %v386, %v384
        %v415 = vpack.c.b16 %v387, %v385
        %v416 = vpack.c.b16 %v390, %v388
        %v417 = vpack.c.b16 %v391, %v389
        %v418 = vpack.c.b16 %v394, %v392
        %v419 = vpack.c.b16 %v395, %v393
        %v420 = vpack.c.b16 %v398, %v396
        %v421 = vpack.c.b16 %v399, %v397
        %v422 = vpack.c.b16 %v402, %v400
        %v423 = vpack.c.b16 %v403, %v401
        %v424 = vpack.c.b16 %v406, %v404
        %v425 = vpack.c.b16 %v407, %v405
        %v426 = vpack.c.b16 %v410, %v408
        %v427 = vpack.c.b16 %v411, %v409
        %v476 = vunpack.c.l.b16 %v332
        %v477 = vunpack.c.l.b16 %v333
        %v478 = vunpack.c.l.b16 %v334
        %v479 = vunpack.c.l.b16 %v335
        %v480 = vunpack.c.l.b16 %v336
        %v481 = vunpack.c.l.b16 %v337
        %v482 = vunpack.c.l.b16 %v338
        %v483 = vunpack.c.l.b16 %v339
        %v484 = vunpack.c.l.b16 %v340
        %v485 = vunpack.c.l.b16 %v341
        %v486 = vunpack.c.l.b16 %v342
        %v487 = vunpack.c.l.b16 %v343
        %v488 = vunpack.c.l.b16 %v344
        %v489 = vunpack.c.l.b16 %v345
        %v490 = vunpack.c.l.b16 %v346
        %v491 = vunpack.c.l.b16 %v347
        %v492 = vunpack.c.l.b16 %v348
        %v493 = vunpack.c.l.b16 %v349
        %v494 = vunpack.c.l.b16 %v350
        %v495 = vunpack.c.l.b16 %v351
        %v496 = vunpack.c.l.b16 %v352
        %v497 = vunpack.c.l.b16 %v353
        %v498 = vunpack.c.l.b16 %v354
        %v499 = vunpack.c.l.b16 %v355
        %v500 = vunpack.c.l.b16 %v356
        %v501 = vunpack.c.l.b16 %v357
        %v502 = vunpack.c.l.b16 %v358
        %v503 = vunpack.c.l.b16 %v359
        %v504 = vunpack.c.l.b16 %v360
        %v505 = vunpack.c.l.b16 %v361
        %v506 = vunpack.c.l.b16 %v362
        %v507 = vunpack.c.l.b16 %v363
        %v508 = vpack.c.b16 %v477, %v476
        %v509 = vpack.c.b16 %v479, %v478
        %v510 = vpack.c.b16 %v481, %v480
        %v511 = vpack.c.b16 %v483, %v482
        %v512 = vpack.c.b16 %v485, %v484
        %v513 = vpack.c.b16 %v487, %v486
        %v514 = vpack.c.b16 %v489, %v488
        %v515 = vpack.c.b16 %v491, %v490
        %v516 = vpack.c.b16 %v493, %v492
        %v517 = vpack.c.b16 %v495, %v494
        %v518 = vpack.c.b16 %v497, %v496
        %v519 = vpack.c.b16 %v499, %v498
        %v520 = vpack.c.b16 %v501, %v500
        %v521 = vpack.c.b16 %v503, %v502
        %v522 = vpack.c.b16 %v505, %v504
        %v523 = vpack.c.b16 %v507, %v506
        %540 = vmatprep.subr.bf16.mxu0 0
        %541 = vmatpush1.bf16.msra.mxu0 %v515
        %542 = vmatprep.subr.bf16.mxu0 0
        %543 = vmatpush1.bf16.msra.mxu0 %v514
        %544 = vmatprep.subr.bf16.mxu0 0
        %545 = vmatpush1.bf16.msra.mxu0 %v513
        %546 = vmatprep.subr.bf16.mxu0 0
        %547 = vmatpush1.bf16.msra.mxu0 %v512
        %548 = vmatprep.subr.bf16.mxu0 0
        %549 = vmatpush1.bf16.msra.mxu0 %v511
        %550 = vmatprep.subr.bf16.mxu0 0
        %551 = vmatpush1.bf16.msra.mxu0 %v510
        %552 = vmatprep.subr.bf16.mxu0 0
        %553 = vmatpush1.bf16.msra.mxu0 %v509
        %554 = vmatprep.subr.bf16.mxu0 0
        %555 = vmatpush1.bf16.msra.mxu0 %v508
        %556 = vmatprep.subr.bf16.mxu0 0
        %557 = vmatpush2.bf16.msra.mxu0 %v523
        %558 = vmatprep.subr.bf16.mxu0 0
        %559 = vmatpush2.bf16.msra.mxu0 %v522
        %560 = vmatprep.subr.bf16.mxu0 0
        %561 = vmatpush2.bf16.msra.mxu0 %v521
        %562 = vmatprep.subr.bf16.mxu0 0
        %563 = vmatpush2.bf16.msra.mxu0 %v520
        %564 = vmatprep.subr.bf16.mxu0 0
        %565 = vmatpush2.bf16.msra.mxu0 %v519
        %566 = vmatprep.subr.bf16.mxu0 0
        %567 = vmatpush2.bf16.msra.mxu0 %v518
        %568 = vmatprep.subr.bf16.mxu0 0
        %569 = vmatpush2.bf16.msra.mxu0 %v517
        %570 = vmatprep.subr.bf16.mxu0 0
        %571 = vmatpush2.bf16.msra.mxu0 %v516
        %572 = vmatprep.mubr.bf16.mxu0 %v413
        %573 = vmatmul.mubr.bf16.gmra.mxu0 %v412
        %v574 = vpop.f32.mrf.mxu0
        %v575 = vadd.f32 0.0, %v574
        %v576 = vpop.f32.mrf.mxu0
        %v577 = vpop.f32.mrf.mxu0
        %v578 = vadd.f32 0.0, %v577
        %v579 = vpop.f32.mrf.mxu0
        %580 = vmatprep.mubr.bf16.mxu0 %v415
        %581 = vmatmul.mubr.bf16.gmra.mxu0 %v414
        %v582 = vpop.f32.mrf.mxu0
        %v583 = vadd.f32 0.0, %v582
        %v584 = vpop.f32.mrf.mxu0
        %v585 = vpop.f32.mrf.mxu0
        %v586 = vadd.f32 0.0, %v585
        %v587 = vpop.f32.mrf.mxu0
        %588 = vmatprep.mubr.bf16.mxu0 %v417
        %589 = vmatmul.mubr.bf16.gmra.mxu0 %v416
        %v590 = vpop.f32.mrf.mxu0
        %v591 = vadd.f32 0.0, %v590
        %v592 = vpop.f32.mrf.mxu0
        %v593 = vpop.f32.mrf.mxu0
        %v594 = vadd.f32 0.0, %v593
        %v595 = vpop.f32.mrf.mxu0
        %596 = vmatprep.mubr.bf16.mxu0 %v419
        %597 = vmatmul.mubr.bf16.gmra.mxu0 %v418
        %v598 = vpop.f32.mrf.mxu0
        %v599 = vadd.f32 0.0, %v598
        %v600 = vpop.f32.mrf.mxu0
        %v601 = vpop.f32.mrf.mxu0
        %v602 = vadd.f32 0.0, %v601
        %v603 = vpop.f32.mrf.mxu0
        %604 = vmatprep.mubr.bf16.mxu0 %v421
        %605 = vmatmul.mubr.bf16.gmra.mxu0 %v420
        %v606 = vpop.f32.mrf.mxu0
        %v607 = vadd.f32 0.0, %v606
        %v608 = vpop.f32.mrf.mxu0
        %v609 = vpop.f32.mrf.mxu0
        %v610 = vadd.f32 0.0, %v609
        %v611 = vpop.f32.mrf.mxu0
        %612 = vmatprep.mubr.bf16.mxu0 %v423
        %613 = vmatmul.mubr.bf16.gmra.mxu0 %v422
        %v614 = vpop.f32.mrf.mxu0
        %v615 = vadd.f32 0.0, %v614
        %v616 = vpop.f32.mrf.mxu0
        %v617 = vpop.f32.mrf.mxu0
        %v618 = vadd.f32 0.0, %v617
        %v619 = vpop.f32.mrf.mxu0
        %620 = vmatprep.mubr.bf16.mxu0 %v425
        %621 = vmatmul.mubr.bf16.gmra.mxu0 %v424
        %v622 = vpop.f32.mrf.mxu0
        %v623 = vadd.f32 0.0, %v622
        %v624 = vpop.f32.mrf.mxu0
        %v625 = vpop.f32.mrf.mxu0
        %v626 = vadd.f32 0.0, %v625
        %v627 = vpop.f32.mrf.mxu0
        %628 = vmatprep.mubr.bf16.mxu0 %v427
        %629 = vmatmul.mubr.bf16.gmra.mxu0 %v426
        %v630 = vpop.f32.mrf.mxu0
        %v631 = vadd.f32 0.0, %v630
        %v632 = vpop.f32.mrf.mxu0
        %v633 = vpop.f32.mrf.mxu0
        %v634 = vadd.f32 0.0, %v633
        %v635 = vpop.f32.mrf.mxu0
        %636 = vdwg.mxu0
        %v637 = vadd.f32 %v300, %v575
        %v638 = vadd.f32 %v301, %v578
        %v639 = vadd.f32 %v302, %v583
        %v640 = vadd.f32 %v303, %v586
        %v641 = vadd.f32 %v304, %v591
        %v642 = vadd.f32 %v305, %v594
        %v643 = vadd.f32 %v306, %v599
        %v644 = vadd.f32 %v307, %v602
        %v645 = vadd.f32 %v308, %v607
        %v646 = vadd.f32 %v309, %v610
        %v647 = vadd.f32 %v310, %v615
        %v648 = vadd.f32 %v311, %v618
        %v649 = vadd.f32 %v312, %v623
        %v650 = vadd.f32 %v313, %v626
        %v651 = vadd.f32 %v314, %v631
        %v652 = vadd.f32 %v315, %v634
        %vm653 = vcmask 523264
        %654 = vst.msk [vmem:[#allocation2] sm:$0xff] %vm653, %v637
        %655 = vst.msk [vmem:[#allocation2 + $0x8] sm:$0xff] %vm653, %v638
        %656 = vst.msk [vmem:[#allocation2 + $0x10] sm:$0xff] %vm653, %v639
        %657 = vst.msk [vmem:[#allocation2 + $0x18] sm:$0xff] %vm653, %v640
        %658 = vst.msk [vmem:[#allocation2 + $0x20] sm:$0xff] %vm653, %v641
        %659 = vst.msk [vmem:[#allocation2 + $0x28] sm:$0xff] %vm653, %v642
        %660 = vst.msk [vmem:[#allocation2 + $0x30] sm:$0xff] %vm653, %v643
        %661 = vst.msk [vmem:[#allocation2 + $0x38] sm:$0xff] %vm653, %v644
        %662 = vst.msk [vmem:[#allocation2 + $0x40] sm:$0xff] %vm653, %v645
        %663 = vst.msk [vmem:[#allocation2 + $0x48] sm:$0xff] %vm653, %v646
        %664 = vst.msk [vmem:[#allocation2 + $0x50] sm:$0xff] %vm653, %v647
        %665 = vst.msk [vmem:[#allocation2 + $0x58] sm:$0xff] %vm653, %v648
        %666 = vst.msk [vmem:[#allocation2 + $0x60] sm:$0xff] %vm653, %v649
        %667 = vst.msk [vmem:[#allocation2 + $0x68] sm:$0xff] %vm653, %v650
        %668 = vst.msk [vmem:[#allocation2 + $0x70] sm:$0xff] %vm653, %v651
        %669 = vst.msk [vmem:[#allocation2 + $0x78] sm:$0xff] %vm653, %v652
        // Predicated region
        $region37: #{tpu_custom_call.1} parent=27 // pred_check
          %p670 = pneg %p279
        $region38: #{tpu_custom_call.1} parent=27 // pred_check_branch
          %672 = sbr.rel (%p670) target = $region40
        $region39: #{tpu_custom_call.1} parent=27 // pred_region
          %v673 = vld [vmem:[#allocation2] sm:$0xff]
          %v674 = vld [vmem:[#allocation2 + $0x8] sm:$0xff]
          %v675 = vld [vmem:[#allocation2 + $0x10] sm:$0xff]
          %v676 = vld [vmem:[#allocation2 + $0x18] sm:$0xff]
          %v677 = vld [vmem:[#allocation2 + $0x20] sm:$0xff]
          %v678 = vld [vmem:[#allocation2 + $0x28] sm:$0xff]
          %v679 = vld [vmem:[#allocation2 + $0x30] sm:$0xff]
          %v680 = vld [vmem:[#allocation2 + $0x38] sm:$0xff]
          %v681 = vld [vmem:[#allocation2 + $0x40] sm:$0xff]
          %v682 = vld [vmem:[#allocation2 + $0x48] sm:$0xff]
          %v683 = vld [vmem:[#allocation2 + $0x50] sm:$0xff]
          %v684 = vld [vmem:[#allocation2 + $0x58] sm:$0xff]
          %v685 = vld [vmem:[#allocation2 + $0x60] sm:$0xff]
          %v686 = vld [vmem:[#allocation2 + $0x68] sm:$0xff]
          %v687 = vld [vmem:[#allocation2 + $0x70] sm:$0xff]
          %v688 = vld [vmem:[#allocation2 + $0x78] sm:$0xff]
          %v689 = vpack.c.bf16 %v674, %v673
          %v690 = vpack.c.bf16 %v676, %v675
          %v691 = vpack.c.bf16 %v678, %v677
          %v692 = vpack.c.bf16 %v680, %v679
          %v693 = vpack.c.bf16 %v682, %v681
          %v694 = vpack.c.bf16 %v684, %v683
          %v695 = vpack.c.bf16 %v686, %v685
          %v696 = vpack.c.bf16 %v688, %v687
          %v705 = vunpack.c.l.b16 %v689
          %v706 = vunpack.c.h.b16 %v689
          %v707 = vunpack.c.l.b16 %v690
          %v708 = vunpack.c.h.b16 %v690
          %v709 = vunpack.c.l.b16 %v691
          %v710 = vunpack.c.h.b16 %v691
          %v711 = vunpack.c.l.b16 %v692
          %v712 = vunpack.c.h.b16 %v692
          %v713 = vunpack.c.l.b16 %v693
          %v714 = vunpack.c.h.b16 %v693
          %v715 = vunpack.c.l.b16 %v694
          %v716 = vunpack.c.h.b16 %v694
          %v717 = vunpack.c.l.b16 %v695
          %v718 = vunpack.c.h.b16 %v695
          %v719 = vunpack.c.l.b16 %v696
          %v720 = vunpack.c.h.b16 %v696
          %v721 = vpack.c.b16 %v705, %v705
          %v722 = vpack.c.b16 %v706, %v706
          %v723 = vpack.c.b16 %v707, %v707
          %v724 = vpack.c.b16 %v708, %v708
          %v725 = vpack.c.b16 %v709, %v709
          %v726 = vpack.c.b16 %v710, %v710
          %v727 = vpack.c.b16 %v711, %v711
          %v728 = vpack.c.b16 %v712, %v712
          %v729 = vpack.c.b16 %v713, %v713
          %v730 = vpack.c.b16 %v714, %v714
          %v731 = vpack.c.b16 %v715, %v715
          %v732 = vpack.c.b16 %v716, %v716
          %v733 = vpack.c.b16 %v717, %v717
          %v734 = vpack.c.b16 %v718, %v718
          %v735 = vpack.c.b16 %v719, %v719
          %v736 = vpack.c.b16 %v720, %v720
          %vm753 = vcmask 519168
          %754 = vst.msk [vmem:[%s269] sm:$0xf] %vm753, %v721
          %755 = vst.msk [vmem:[%s269 + $0x4] sm:$0xf] %vm753, %v722
          %756 = vst.msk [vmem:[%s269 + $0x8] sm:$0xf] %vm753, %v723
          %757 = vst.msk [vmem:[%s269 + $0xc] sm:$0xf] %vm753, %v724
          %758 = vst.msk [vmem:[%s269 + $0x10] sm:$0xf] %vm753, %v725
          %759 = vst.msk [vmem:[%s269 + $0x14] sm:$0xf] %vm753, %v726
          %760 = vst.msk [vmem:[%s269 + $0x18] sm:$0xf] %vm753, %v727
          %761 = vst.msk [vmem:[%s269 + $0x1c] sm:$0xf] %vm753, %v728
          %762 = vst.msk [vmem:[%s269 + $0x20] sm:$0xf] %vm753, %v729
          %763 = vst.msk [vmem:[%s269 + $0x24] sm:$0xf] %vm753, %v730
          %764 = vst.msk [vmem:[%s269 + $0x28] sm:$0xf] %vm753, %v731
          %765 = vst.msk [vmem:[%s269 + $0x2c] sm:$0xf] %vm753, %v732
          %766 = vst.msk [vmem:[%s269 + $0x30] sm:$0xf] %vm753, %v733
          %767 = vst.msk [vmem:[%s269 + $0x34] sm:$0xf] %vm753, %v734
          %768 = vst.msk [vmem:[%s269 + $0x38] sm:$0xf] %vm753, %v735
          %769 = vst.msk [vmem:[%s269 + $0x3c] sm:$0xf] %vm753, %v736
          %v770 = vsel %vm653, %v673, 0.0
          %v771 = vsel %vm653, %v674, 0.0
          %v772 = vadd.f32 %v770, %v771
          %v773 = vsel %vm653, %v675, 0.0
          %v774 = vadd.f32 %v772, %v773
          %v775 = vsel %vm653, %v676, 0.0
          %v776 = vadd.f32 %v774, %v775
          %v777 = vsel %vm653, %v677, 0.0
          %v778 = vadd.f32 %v776, %v777
          %v779 = vsel %vm653, %v678, 0.0
          %v780 = vadd.f32 %v778, %v779
          %v781 = vsel %vm653, %v679, 0.0
          %v782 = vadd.f32 %v780, %v781
          %v783 = vsel %vm653, %v680, 0.0
          %v784 = vadd.f32 %v782, %v783
          %v785 = vsel %vm653, %v681, 0.0
          %v786 = vadd.f32 %v784, %v785
          %v787 = vsel %vm653, %v682, 0.0
          %v788 = vadd.f32 %v786, %v787
          %v789 = vsel %vm653, %v683, 0.0
          %v790 = vadd.f32 %v788, %v789
          %v791 = vsel %vm653, %v684, 0.0
          %v792 = vadd.f32 %v790, %v791
          %v793 = vsel %vm653, %v685, 0.0
          %v794 = vadd.f32 %v792, %v793
          %v795 = vsel %vm653, %v686, 0.0
          %v796 = vadd.f32 %v794, %v795
          %v797 = vsel %vm653, %v687, 0.0
          %v798 = vadd.f32 %v796, %v797
          %v799 = vsel %vm653, %v688, 0.0
          %v800 = vadd.f32 %v798, %v799
          %v801 = vrot.slane %v800, 4
          %v802 = vadd.f32 %v800, %v801
          %v803 = vrot.slane %v802, 2
          %v804 = vadd.f32 %v802, %v803
          %v805 = vrot.slane %v804, 1
          %v806 = vadd.f32 %v804, %v805
          %vm807 = vcmask 516096
          %808 = vst.msk [vmem:[%s277] sm:$0x1] %vm807, %v806
          %v809 = vmul.f32 %v673, %v673
          %v810 = vmul.f32 %v674, %v674
          %v811 = vmul.f32 %v675, %v675
          %v812 = vmul.f32 %v676, %v676
          %v813 = vmul.f32 %v677, %v677
          %v814 = vmul.f32 %v678, %v678
          %v815 = vmul.f32 %v679, %v679
          %v816 = vmul.f32 %v680, %v680
          %v817 = vmul.f32 %v681, %v681
          %v818 = vmul.f32 %v682, %v682
          %v819 = vmul.f32 %v683, %v683
          %v820 = vmul.f32 %v684, %v684
          %v821 = vmul.f32 %v685, %v685
          %v822 = vmul.f32 %v686, %v686
          %v823 = vmul.f32 %v687, %v687
          %v824 = vmul.f32 %v688, %v688
          %v825 = vsel %vm653, %v809, 0.0
          %v826 = vsel %vm653, %v810, 0.0
          %v827 = vadd.f32 %v825, %v826
          %v828 = vsel %vm653, %v811, 0.0
          %v829 = vadd.f32 %v827, %v828
          %v830 = vsel %vm653, %v812, 0.0
          %v831 = vadd.f32 %v829, %v830
          %v832 = vsel %vm653, %v813, 0.0
          %v833 = vadd.f32 %v831, %v832
          %v834 = vsel %vm653, %v814, 0.0
          %v835 = vadd.f32 %v833, %v834
          %v836 = vsel %vm653, %v815, 0.0
          %v837 = vadd.f32 %v835, %v836
          %v838 = vsel %vm653, %v816, 0.0
          %v839 = vadd.f32 %v837, %v838
          %v840 = vsel %vm653, %v817, 0.0
          %v841 = vadd.f32 %v839, %v840
          %v842 = vsel %vm653, %v818, 0.0
          %v843 = vadd.f32 %v841, %v842
          %v844 = vsel %vm653, %v819, 0.0
          %v845 = vadd.f32 %v843, %v844
          %v846 = vsel %vm653, %v820, 0.0
          %v847 = vadd.f32 %v845, %v846
          %v848 = vsel %vm653, %v821, 0.0
          %v849 = vadd.f32 %v847, %v848
          %v850 = vsel %vm653, %v822, 0.0
          %v851 = vadd.f32 %v849, %v850
          %v852 = vsel %vm653, %v823, 0.0
          %v853 = vadd.f32 %v851, %v852
          %v854 = vsel %vm653, %v824, 0.0
          %v855 = vadd.f32 %v853, %v854
          %v856 = vrot.slane %v855, 4
          %v857 = vadd.f32 %v855, %v856
          %v858 = vrot.slane %v857, 2
          %v859 = vadd.f32 %v857, %v858
          %v860 = vrot.slane %v859, 1
          %v861 = vadd.f32 %v859, %v860
          %862 = vst.msk [vmem:[%s277 + $0x1] sm:$0x1] %vm807, %v861
        $region40: #{tpu_custom_call.1} parent=27 // pred_fallthru
          _
        %s863 = smul.u32 16, %s23
        %p864 = scmp.lt.s32.totalorder %s863, 511
        %s865 = scalar_select %p864, %s863, 511
        %p866 = scmp.lt.s32.totalorder %s24, 0
        %s867 = scalar_select %p866, %s24, 0
        %s868 = sadd.s32 %s867, %s865
        %s869 = smul.addr %s868, 4
        %s870 = scalar_lea.vmem %s2, %s869
        %p871 = scmp.lt.s32.totalorder %s23, 31
        %s872 = scalar_select %p871, %s23, 31
        %p873 = scmp.lt.s32.totalorder %s24, 0
        %s874 = scalar_select %p873, %s24, 0
        %s875 = sadd.s32 %s874, %s872
        %s876 = smul.addr %s875, 8
        %s877 = scalar_lea.vmem %s3, %s876
        // Predicated region
        $region41: #{tpu_custom_call.1} parent=27 // pred_check
          %p878 = pneg %p113
        $region42: #{tpu_custom_call.1} parent=27 // pred_check_branch
          %880 = sbr.rel (%p878) target = $region44
        $region43: #{tpu_custom_call.1} parent=27 // pred_region
          %s881 = smul.u32 16, %s23
        $region44: #{tpu_custom_call.1} parent=27 // pred_fallthru
          _
        // Predicated region
        $region45: #{tpu_custom_call.1} parent=27 // pred_check
          %p882 = pneg %p141
        $region46: #{tpu_custom_call.1} parent=27 // pred_check_branch
          %884 = sbr.rel (%p882) target = $region48
        $region47: #{tpu_custom_call.1} parent=27 // pred_region
          _
        $region48: #{tpu_custom_call.1} parent=27 // pred_fallthru
          _
      $region28: #{tpu_custom_call.1} parent=5 // pred_fallthru
        _
      %p885 = scmp.le.s32.totalorder 2, %s13
      // Predicated region
      $region49: #{tpu_custom_call.1} parent=5 // pred_check
        %p886 = pneg %p885
      $region50: #{tpu_custom_call.1} parent=5 // pred_check_branch
        %888 = sbr.rel (%p886) target = $region52
      $region51: #{tpu_custom_call.1} parent=5 // pred_region
        %s889 = ssub.s32 %s13, 2
        // Predicated region
        $region53: #{tpu_custom_call.1} parent=51 // pred_check
          %p890 = pneg %p119
        $region54: #{tpu_custom_call.1} parent=51 // pred_check_branch
          %892 = sbr.rel (%p890) target = $region56
        $region55: #{tpu_custom_call.1} parent=51 // pred_region
          %s893 = smul.u32 16, %s26
          %p894 = scmp.lt.s32.totalorder %s893, 511
          %s895 = scalar_select %p894, %s893, 511
          %p896 = scmp.lt.s32.totalorder %s27, 0
          %s897 = scalar_select %p896, %s27, 0
          %s898 = sadd.s32 %s897, %s895
          %s899 = smul.addr %s898, 4
          %s900 = scalar_lea.vmem %s2, %s899
        $region56: #{tpu_custom_call.1} parent=51 // pred_fallthru
          _
        // Predicated region
        $region57: #{tpu_custom_call.1} parent=51 // pred_check
          %p901 = pneg %p147
        $region58: #{tpu_custom_call.1} parent=51 // pred_check_branch
          %903 = sbr.rel (%p901) target = $region60
        $region59: #{tpu_custom_call.1} parent=51 // pred_region
          %p904 = scmp.lt.s32.totalorder %s26, 31
          %s905 = scalar_select %p904, %s26, 31
          %p906 = scmp.lt.s32.totalorder %s27, 0
          %s907 = scalar_select %p906, %s27, 0
          %s908 = sadd.s32 %s907, %s905
          %s909 = smul.addr %s908, 8
          %s910 = scalar_lea.vmem %s3, %s909
        $region60: #{tpu_custom_call.1} parent=51 // pred_fallthru
          _
      $region52: #{tpu_custom_call.1} parent=5 // pred_fallthru
        _
    $region6: #{tpu_custom_call.1} parent=1 // loop_footer
      %s17 = sadd.s32 1, %s13
    $region7: #{tpu_custom_call.1} parent=1 // loop_footer_branch
      %12 = sbr.rel target = $region3
    $region8: #{tpu_custom_call.1} parent=1 // loop_exit
      _
    %911 = vsyncpa [#allocation4], 1
    %s912 = scalar_lea.sflag [#allocation4], 1
    %913 = vsyncpa %s912, 1

</llo_original>
